<compile_context>
chip_gen: v5e
topology: v5e:2x2
jax: 0.10.0
libtpu: 0.0.40
codegen_flags: <defaults>
</compile_context>

<pallas_src>
import functools
import math

import jax
import jax.numpy as jnp
from jax import lax
from jax.experimental import pallas as pl
from jax.experimental.pallas import tpu as pltpu


def _round_up(x, m):
    return ((x + m - 1) // m) * m


def dueling_ff_kernel(x_ref, w_in_ref, w_h_ref, vecs_ref,
                      w_advh_ref, w_advx_ref, b_adv_ref, out_ref,
                      *, n_layers, mid_dim, out_dim, eps):
    x0 = x_ref[...]                                              # [tb, in_dim]

    # input layer + ReLU  (MXU, f32 accumulation)
    h = jnp.dot(x0, w_in_ref[...], preferred_element_type=jnp.float32) + vecs_ref[0]
    h = jnp.maximum(h, 0.0)

    # hidden stack: Linear -> LayerNorm -> ReLU  (statically unrolled)
    inv_n = 1.0 / mid_dim
    for l in range(n_layers):
        z = (jnp.dot(h, w_h_ref[l], preferred_element_type=jnp.float32)
             + vecs_ref[1 + 3 * l])
        # single-pass LN stats: sum(z) and sum(z*z) are independent lane
        # reductions, so the XLUs can overlap them.
        mu = jnp.sum(z, axis=-1, keepdims=True) * inv_n
        ez2 = jnp.sum(z * z, axis=-1, keepdims=True) * inv_n
        var = ez2 - mu * mu
        zn = (z - mu) * lax.rsqrt(var + eps)                     # EUP rsqrt (free slot)
        h = jnp.maximum(zn * vecs_ref[2 + 3 * l] + vecs_ref[3 + 3 * l], 0.0)

    # fused heads: the lane-padded matmuls compute the advantage head in
    # columns [0, out_dim) and the value head in column `out_dim`; all other
    # padded columns (weights and bias) are exactly zero.
    q = (jnp.dot(h, w_advh_ref[...], preferred_element_type=jnp.float32) +
         jnp.dot(x0, w_advx_ref[...], preferred_element_type=jnp.float32) +
         b_adv_ref[...])
    value = q[:, out_dim:out_dim + 1]
    # row sum over all padded lanes minus the value column == sum over the
    # true out_dim advantage columns (padding is zero) -> exact mean.
    adv_mean = (jnp.sum(q, axis=-1, keepdims=True) - value) * (1.0 / out_dim)
    out_ref[...] = value + (q - adv_mean)


def dueling_ff(x, params, *, eps=1e-5, interpret=False):
    x = jnp.asarray(x, jnp.float32)
    B, in_dim = x.shape
    w_in = jnp.asarray(params["w_in"], jnp.float32)
    mid_dim = w_in.shape[1]
    w_h = jnp.asarray(params["w_h"], jnp.float32)
    n_layers = w_h.shape[0]
    w_ao = jnp.asarray(params["w_ao"], jnp.float32)
    out_dim = w_ao.shape[1]

    # ---- batch tiling ------------------------------------------------------
    # Big tiles amortize the ~0.35 us per-grid-step overhead; split into at
    # least two tiles when possible so v7x megacore shards the batch across
    # both TensorCores.  No per-generation tile tuning needed: even at tb=1024
    # the double-buffered working set is ~1.3 MiB (<< 64 MiB on v7x).
    B8 = _round_up(B, 8)
    tb = min(1024, max(8, _round_up(-(-B8 // 2), 8)))
    B_pad = _round_up(B8, tb)
    if B_pad != B:
        x = jnp.pad(x, ((0, B_pad - B), (0, 0)))

    # ---- parameter packing (one-time, wrapper side) -------------------------
    # Lane-dense output: pad columns to a multiple of 128, fold the two value
    # heads into column `out_dim` of the advantage weights, pre-sum biases.
    out_pad = _round_up(out_dim + 1, 128)

    w_vo = jnp.asarray(params["w_vo"], jnp.float32).reshape(mid_dim)
    w_vh = jnp.asarray(params["w_vh"], jnp.float32).reshape(in_dim)
    b_vo = jnp.asarray(params["b_vo"], jnp.float32).reshape(())
    b_vh = jnp.asarray(params["b_vh"], jnp.float32).reshape(())
    w_ah = jnp.asarray(params["w_ah"], jnp.float32)
    b_ao = jnp.asarray(params["b_ao"], jnp.float32).reshape(out_dim)
    b_ah = jnp.asarray(params["b_ah"], jnp.float32).reshape(out_dim)

    w_advh = jnp.zeros((mid_dim, out_pad), jnp.float32)
    w_advh = w_advh.at[:, :out_dim].set(w_ao).at[:, out_dim].set(w_vo)
    w_advx = jnp.zeros((in_dim, out_pad), jnp.float32)
    w_advx = w_advx.at[:, :out_dim].set(w_ah).at[:, out_dim].set(w_vh)
    b_adv = jnp.zeros((1, out_pad), jnp.float32)
    b_adv = b_adv.at[0, :out_dim].set(b_ao + b_ah).at[0, out_dim].set(b_vo + b_vh)

    # input bias + per-layer (bias, gamma, beta) stacked into one small operand
    # -> fewer DMA descriptors / semaphores / double-buffers in the prologue.
    b_in = jnp.asarray(params["b_in"], jnp.float32).reshape(1, mid_dim)
    b_h = jnp.asarray(params["b_h"], jnp.float32).reshape(n_layers, mid_dim)
    gamma = jnp.asarray(params["gamma"], jnp.float32).reshape(n_layers, mid_dim)
    beta = jnp.asarray(params["beta"], jnp.float32).reshape(n_layers, mid_dim)
    vecs = jnp.concatenate(
        [b_in,
         jnp.stack([b_h, gamma, beta], axis=1).reshape(3 * n_layers, mid_dim)],
        axis=0)                                          # [1 + 3*n_layers, mid_dim]

    operands = (x, w_in, w_h, vecs, w_advh, w_advx, b_adv)

    # weights: one full-array VMEM block, constant block index across the grid
    def rep_spec(a):
        nd = a.ndim
        return pl.BlockSpec(a.shape, lambda i, _nd=nd: (0,) * _nd)

    in_specs = [pl.BlockSpec((tb, in_dim), lambda i: (i, 0))]
    in_specs += [rep_spec(a) for a in operands[1:]]

    out = pl.pallas_call(
        functools.partial(dueling_ff_kernel, n_layers=n_layers,
                          mid_dim=mid_dim, out_dim=out_dim, eps=eps),
        out_shape=jax.ShapeDtypeStruct((B_pad, out_pad), jnp.float32),
        grid=(B_pad // tb,),
        in_specs=in_specs,
        out_specs=pl.BlockSpec((tb, out_pad), lambda i: (i, 0)),
        compiler_params=pltpu.CompilerParams(
            dimension_semantics=("parallel",)),
        interpret=interpret,
    )(*operands)
    return out[:B, :out_dim]


def dueling_ff_ref(x, params, eps=1e-5):
    # pure-JAX reference mirroring the PyTorch forward
    # (weights are already stored as [in, out], i.e. torch W.T)
    x = jnp.asarray(x, jnp.float32)
    h = jax.nn.relu(x @ params["w_in"] + params["b_in"])
    n_layers = params["w_h"].shape[0]
    for l in range(n_layers):
        z = h @ params["w_h"][l] + params["b_h"][l]
        mu = z.mean(-1, keepdims=True)
        var = ((z - mu) ** 2).mean(-1, keepdims=True)
        zn = (z - mu) / jnp.sqrt(var + eps)
        h = jax.nn.relu(zn * params["gamma"][l] + params["beta"][l])
    value = (h @ params["w_vo"].reshape(-1, 1) + params["b_vo"] +
             x @ params["w_vh"].reshape(-1, 1) + params["b_vh"])
    adv = (h @ params["w_ao"] + params["b_ao"] +
           x @ params["w_ah"] + params["b_ah"])
    adv_mean = adv.mean(1, keepdims=True)
    return value + (adv - adv_mean)


if __name__ == "__main__":
    in_dim, mid_dim, out_dim, n_layers = 32, 64, 16, 2
    batch = 8

    key = jax.random.PRNGKey(0)
    ks = jax.random.split(key, 16)

    def init(k, shape, fan_in):
        return jax.random.normal(k, shape, jnp.float32) / math.sqrt(fan_in)

    # Linear weights stored as [in, out] (== torch weight.T) to avoid any
    # in-kernel transpose; LayerNorm gamma/beta made non-trivial for the test.
    params = dict(
        w_in=init(ks[0], (in_dim, mid_dim), in_dim),
        b_in=init(ks[1], (mid_dim,), in_dim),
        w_h=init(ks[2], (n_layers, mid_dim, mid_dim), mid_dim),
        b_h=init(ks[3], (n_layers, mid_dim), mid_dim),
        gamma=1.0 + 0.1 * jax.random.normal(ks[4], (n_layers, mid_dim), jnp.float32),
        beta=0.1 * jax.random.normal(ks[5], (n_layers, mid_dim), jnp.float32),
        w_vo=init(ks[6], (mid_dim,), mid_dim),
        b_vo=init(ks[7], (1,), mid_dim),
        w_vh=init(ks[8], (in_dim,), in_dim),
        b_vh=init(ks[9], (1,), in_dim),
        w_ao=init(ks[10], (mid_dim, out_dim), mid_dim),
        b_ao=init(ks[11], (out_dim,), mid_dim),
        w_ah=init(ks[12], (in_dim, out_dim), in_dim),
        b_ah=init(ks[13], (out_dim,), in_dim),
    )

    x = jax.random.normal(ks[14], (batch, in_dim), jnp.float32)

    out = dueling_ff(x, params)
    out = jax.block_until_ready(out)

    ref = dueling_ff_ref(x, params)
    assert out.shape == (batch, out_dim), out.shape
    assert jnp.allclose(out, ref, atol=1e-4, rtol=1e-4), (out, ref)

    print("KERNEL_OK")
</pallas_src>

<mosaic_0001>
module attributes {stable_mosaic.version = 11 : i64} {
  func.func @dueling_ff_kernel(%arg0: i32, %arg1: memref<8x32xf32, #tpu.memory_space<vmem>>, %arg2: memref<32x64xf32, #tpu.memory_space<vmem>>, %arg3: memref<2x64x64xf32, #tpu.memory_space<vmem>>, %arg4: memref<7x64xf32, #tpu.memory_space<vmem>>, %arg5: memref<64x128xf32, #tpu.memory_space<vmem>>, %arg6: memref<32x128xf32, #tpu.memory_space<vmem>>, %arg7: memref<1x128xf32, #tpu.memory_space<vmem>>, %arg8: memref<8x128xf32, #tpu.memory_space<vmem>>) attributes {dimension_semantics = [#tpu.dimension_semantics<parallel>], iteration_bounds = array<i64: 1>, scalar_prefetch = 0 : i64, scratch_operands = 0 : i64, tpu.core_type = #tpu.core_type<tc>, window_params = [{transform_indices = @transform_0, window_bounds = array<i64: 8, 32>}, {pipeline_mode = #tpu.pipeline_mode<synchronous>, transform_indices = @transform_1, window_bounds = array<i64: 32, 64>}, {pipeline_mode = #tpu.pipeline_mode<synchronous>, transform_indices = @transform_2, window_bounds = array<i64: 2, 64, 64>}, {pipeline_mode = #tpu.pipeline_mode<synchronous>, transform_indices = @transform_3, window_bounds = array<i64: 7, 64>}, {pipeline_mode = #tpu.pipeline_mode<synchronous>, transform_indices = @transform_4, window_bounds = array<i64: 64, 128>}, {pipeline_mode = #tpu.pipeline_mode<synchronous>, transform_indices = @transform_5, window_bounds = array<i64: 32, 128>}, {pipeline_mode = #tpu.pipeline_mode<synchronous>, transform_indices = @transform_6, window_bounds = array<i64: 1, 128>}, {transform_indices = @transform_7, window_bounds = array<i64: 8, 128>}]} {
    %c0 = arith.constant 0 : index
    %c0_0 = arith.constant 0 : index
    %0 = vector.load %arg1[%c0, %c0_0] : memref<8x32xf32, #tpu.memory_space<vmem>>, vector<8x32xf32>
    %c0_1 = arith.constant 0 : index
    %c0_2 = arith.constant 0 : index
    %1 = vector.load %arg2[%c0_1, %c0_2] : memref<32x64xf32, #tpu.memory_space<vmem>>, vector<32x64xf32>
    %cst = arith.constant dense<0.000000e+00> : vector<8x64xf32>
    %2 = tpu.matmul %0, %1, %cst {dimension_numbers = #tpu.dot_dimension_numbers<[1], [0], [0], [1], [0, 0, 1, 1], [], []>} : vector<8x32xf32>, vector<32x64xf32>, vector<8x64xf32> -> vector<8x64xf32>
    %c0_3 = arith.constant 0 : index
    %c0_4 = arith.constant 0 : index
    %3 = vector.load %arg4[%c0_3, %c0_4] : memref<7x64xf32, #tpu.memory_space<vmem>>, vector<1x64xf32>
    %4 = vector.shape_cast %3 : vector<1x64xf32> to vector<64xf32>
    %5 = vector.shape_cast %4 : vector<64xf32> to vector<1x64xf32>
    %6 = vector.broadcast %5 : vector<1x64xf32> to vector<8x64xf32>
    %7 = arith.addf %2, %6 : vector<8x64xf32>
    %cst_5 = arith.constant 0.000000e+00 : f32
    %8 = vector.broadcast %cst_5 : f32 to vector<8x64xf32>
    %9 = arith.maximumf %7, %8 : vector<8x64xf32>
    %c0_6 = arith.constant 0 : index
    %c0_7 = arith.constant 0 : index
    %c0_8 = arith.constant 0 : index
    %10 = vector.load %arg3[%c0_6, %c0_7, %c0_8] : memref<2x64x64xf32, #tpu.memory_space<vmem>>, vector<1x64x64xf32>
    %11 = vector.shape_cast %10 : vector<1x64x64xf32> to vector<64x64xf32>
    %cst_9 = arith.constant dense<0.000000e+00> : vector<8x64xf32>
    %12 = tpu.matmul %9, %11, %cst_9 {dimension_numbers = #tpu.dot_dimension_numbers<[1], [0], [0], [1], [0, 0, 1, 1], [], []>} : vector<8x64xf32>, vector<64x64xf32>, vector<8x64xf32> -> vector<8x64xf32>
    %c1 = arith.constant 1 : index
    %c0_10 = arith.constant 0 : index
    %13 = vector.load %arg4[%c1, %c0_10] : memref<7x64xf32, #tpu.memory_space<vmem>>, vector<1x64xf32>
    %14 = vector.shape_cast %13 : vector<1x64xf32> to vector<64xf32>
    %15 = vector.shape_cast %14 : vector<64xf32> to vector<1x64xf32>
    %16 = vector.broadcast %15 : vector<1x64xf32> to vector<8x64xf32>
    %17 = arith.addf %12, %16 : vector<8x64xf32>
    %cst_11 = arith.constant dense<0.000000e+00> : vector<8xf32>
    %18 = vector.multi_reduction <add>, %17, %cst_11 [1] : vector<8x64xf32> to vector<8xf32>
    %19 = vector.shape_cast %18 : vector<8xf32> to vector<8x1xf32>
    %cst_12 = arith.constant 1.562500e-02 : f32
    %20 = vector.broadcast %cst_12 : f32 to vector<8x1xf32>
    %21 = arith.mulf %19, %20 : vector<8x1xf32>
    %22 = arith.mulf %17, %17 : vector<8x64xf32>
    %cst_13 = arith.constant dense<0.000000e+00> : vector<8xf32>
    %23 = vector.multi_reduction <add>, %22, %cst_13 [1] : vector<8x64xf32> to vector<8xf32>
    %24 = vector.shape_cast %23 : vector<8xf32> to vector<8x1xf32>
    %cst_14 = arith.constant 1.562500e-02 : f32
    %25 = vector.broadcast %cst_14 : f32 to vector<8x1xf32>
    %26 = arith.mulf %24, %25 : vector<8x1xf32>
    %27 = arith.mulf %21, %21 : vector<8x1xf32>
    %28 = arith.subf %26, %27 : vector<8x1xf32>
    %29 = vector.broadcast %21 : vector<8x1xf32> to vector<8x64xf32>
    %30 = arith.subf %17, %29 : vector<8x64xf32>
    %cst_15 = arith.constant 9.99999974E-6 : f32
    %31 = vector.broadcast %cst_15 : f32 to vector<8x1xf32>
    %32 = arith.addf %28, %31 : vector<8x1xf32>
    %33 = math.rsqrt %32 : vector<8x1xf32>
    %34 = vector.broadcast %33 : vector<8x1xf32> to vector<8x64xf32>
    %35 = arith.mulf %30, %34 : vector<8x64xf32>
    %c2 = arith.constant 2 : index
    %c0_16 = arith.constant 0 : index
    %36 = vector.load %arg4[%c2, %c0_16] : memref<7x64xf32, #tpu.memory_space<vmem>>, vector<1x64xf32>
    %37 = vector.shape_cast %36 : vector<1x64xf32> to vector<64xf32>
    %38 = vector.shape_cast %37 : vector<64xf32> to vector<1x64xf32>
    %39 = vector.broadcast %38 : vector<1x64xf32> to vector<8x64xf32>
    %40 = arith.mulf %35, %39 : vector<8x64xf32>
    %c3 = arith.constant 3 : index
    %c0_17 = arith.constant 0 : index
    %41 = vector.load %arg4[%c3, %c0_17] : memref<7x64xf32, #tpu.memory_space<vmem>>, vector<1x64xf32>
    %42 = vector.shape_cast %41 : vector<1x64xf32> to vector<64xf32>
    %43 = vector.shape_cast %42 : vector<64xf32> to vector<1x64xf32>
    %44 = vector.broadcast %43 : vector<1x64xf32> to vector<8x64xf32>
    %45 = arith.addf %40, %44 : vector<8x64xf32>
    %cst_18 = arith.constant 0.000000e+00 : f32
    %46 = vector.broadcast %cst_18 : f32 to vector<8x64xf32>
    %47 = arith.maximumf %45, %46 : vector<8x64xf32>
    %c1_19 = arith.constant 1 : index
    %c0_20 = arith.constant 0 : index
    %c0_21 = arith.constant 0 : index
    %48 = vector.load %arg3[%c1_19, %c0_20, %c0_21] : memref<2x64x64xf32, #tpu.memory_space<vmem>>, vector<1x64x64xf32>
    %49 = vector.shape_cast %48 : vector<1x64x64xf32> to vector<64x64xf32>
    %cst_22 = arith.constant dense<0.000000e+00> : vector<8x64xf32>
    %50 = tpu.matmul %47, %49, %cst_22 {dimension_numbers = #tpu.dot_dimension_numbers<[1], [0], [0], [1], [0, 0, 1, 1], [], []>} : vector<8x64xf32>, vector<64x64xf32>, vector<8x64xf32> -> vector<8x64xf32>
    %c4 = arith.constant 4 : index
    %c0_23 = arith.constant 0 : index
    %51 = vector.load %arg4[%c4, %c0_23] : memref<7x64xf32, #tpu.memory_space<vmem>>, vector<1x64xf32>
    %52 = vector.shape_cast %51 : vector<1x64xf32> to vector<64xf32>
    %53 = vector.shape_cast %52 : vector<64xf32> to vector<1x64xf32>
    %54 = vector.broadcast %53 : vector<1x64xf32> to vector<8x64xf32>
    %55 = arith.addf %50, %54 : vector<8x64xf32>
    %cst_24 = arith.constant dense<0.000000e+00> : vector<8xf32>
    %56 = vector.multi_reduction <add>, %55, %cst_24 [1] : vector<8x64xf32> to vector<8xf32>
    %57 = vector.shape_cast %56 : vector<8xf32> to vector<8x1xf32>
    %cst_25 = arith.constant 1.562500e-02 : f32
    %58 = vector.broadcast %cst_25 : f32 to vector<8x1xf32>
    %59 = arith.mulf %57, %58 : vector<8x1xf32>
    %60 = arith.mulf %55, %55 : vector<8x64xf32>
    %cst_26 = arith.constant dense<0.000000e+00> : vector<8xf32>
    %61 = vector.multi_reduction <add>, %60, %cst_26 [1] : vector<8x64xf32> to vector<8xf32>
    %62 = vector.shape_cast %61 : vector<8xf32> to vector<8x1xf32>
    %cst_27 = arith.constant 1.562500e-02 : f32
    %63 = vector.broadcast %cst_27 : f32 to vector<8x1xf32>
    %64 = arith.mulf %62, %63 : vector<8x1xf32>
    %65 = arith.mulf %59, %59 : vector<8x1xf32>
    %66 = arith.subf %64, %65 : vector<8x1xf32>
    %67 = vector.broadcast %59 : vector<8x1xf32> to vector<8x64xf32>
    %68 = arith.subf %55, %67 : vector<8x64xf32>
    %cst_28 = arith.constant 9.99999974E-6 : f32
    %69 = vector.broadcast %cst_28 : f32 to vector<8x1xf32>
    %70 = arith.addf %66, %69 : vector<8x1xf32>
    %71 = math.rsqrt %70 : vector<8x1xf32>
    %72 = vector.broadcast %71 : vector<8x1xf32> to vector<8x64xf32>
    %73 = arith.mulf %68, %72 : vector<8x64xf32>
    %c5 = arith.constant 5 : index
    %c0_29 = arith.constant 0 : index
    %74 = vector.load %arg4[%c5, %c0_29] : memref<7x64xf32, #tpu.memory_space<vmem>>, vector<1x64xf32>
    %75 = vector.shape_cast %74 : vector<1x64xf32> to vector<64xf32>
    %76 = vector.shape_cast %75 : vector<64xf32> to vector<1x64xf32>
    %77 = vector.broadcast %76 : vector<1x64xf32> to vector<8x64xf32>
    %78 = arith.mulf %73, %77 : vector<8x64xf32>
    %c6 = arith.constant 6 : index
    %c0_30 = arith.constant 0 : index
    %79 = vector.load %arg4[%c6, %c0_30] : memref<7x64xf32, #tpu.memory_space<vmem>>, vector<1x64xf32>
    %80 = vector.shape_cast %79 : vector<1x64xf32> to vector<64xf32>
    %81 = vector.shape_cast %80 : vector<64xf32> to vector<1x64xf32>
    %82 = vector.broadcast %81 : vector<1x64xf32> to vector<8x64xf32>
    %83 = arith.addf %78, %82 : vector<8x64xf32>
    %cst_31 = arith.constant 0.000000e+00 : f32
    %84 = vector.broadcast %cst_31 : f32 to vector<8x64xf32>
    %85 = arith.maximumf %83, %84 : vector<8x64xf32>
    %c0_32 = arith.constant 0 : index
    %c0_33 = arith.constant 0 : index
    %86 = vector.load %arg5[%c0_32, %c0_33] : memref<64x128xf32, #tpu.memory_space<vmem>>, vector<64x128xf32>
    %cst_34 = arith.constant dense<0.000000e+00> : vector<8x128xf32>
    %87 = tpu.matmul %85, %86, %cst_34 {dimension_numbers = #tpu.dot_dimension_numbers<[1], [0], [0], [1], [0, 0, 1, 1], [], []>} : vector<8x64xf32>, vector<64x128xf32>, vector<8x128xf32> -> vector<8x128xf32>
    %c0_35 = arith.constant 0 : index
    %c0_36 = arith.constant 0 : index
    %88 = vector.load %arg6[%c0_35, %c0_36] : memref<32x128xf32, #tpu.memory_space<vmem>>, vector<32x128xf32>
    %cst_37 = arith.constant dense<0.000000e+00> : vector<8x128xf32>
    %89 = tpu.matmul %0, %88, %cst_37 {dimension_numbers = #tpu.dot_dimension_numbers<[1], [0], [0], [1], [0, 0, 1, 1], [], []>} : vector<8x32xf32>, vector<32x128xf32>, vector<8x128xf32> -> vector<8x128xf32>
    %90 = arith.addf %87, %89 : vector<8x128xf32>
    %c0_38 = arith.constant 0 : index
    %c0_39 = arith.constant 0 : index
    %91 = vector.load %arg7[%c0_38, %c0_39] : memref<1x128xf32, #tpu.memory_space<vmem>>, vector<1x128xf32>
    %92 = vector.broadcast %91 : vector<1x128xf32> to vector<8x128xf32>
    %93 = arith.addf %90, %92 : vector<8x128xf32>
    %94 = vector.extract_strided_slice %93 {offsets = [0, 16], sizes = [8, 1], strides = [1, 1]} : vector<8x128xf32> to vector<8x1xf32>
    %cst_40 = arith.constant dense<0.000000e+00> : vector<8xf32>
    %95 = vector.multi_reduction <add>, %93, %cst_40 [1] : vector<8x128xf32> to vector<8xf32>
    %96 = vector.shape_cast %95 : vector<8xf32> to vector<8x1xf32>
    %97 = arith.subf %96, %94 : vector<8x1xf32>
    %cst_41 = arith.constant 6.250000e-02 : f32
    %98 = vector.broadcast %cst_41 : f32 to vector<8x1xf32>
    %99 = arith.mulf %97, %98 : vector<8x1xf32>
    %100 = vector.broadcast %99 : vector<8x1xf32> to vector<8x128xf32>
    %101 = arith.subf %93, %100 : vector<8x128xf32>
    %102 = vector.broadcast %94 : vector<8x1xf32> to vector<8x128xf32>
    %103 = arith.addf %102, %101 : vector<8x128xf32>
    %c0_42 = arith.constant 0 : index
    %c0_43 = arith.constant 0 : index
    %104 = vector.load %arg8[%c0_42, %c0_43] : memref<8x128xf32, #tpu.memory_space<vmem>>, vector<8x128xf32>
    tpu.vector_store %arg8[%c0_42, %c0_43], %103 {strides = array<i32>} : memref<8x128xf32, #tpu.memory_space<vmem>>, vector<8x128xf32>,
    return
  }
  func.func @transform_0(%arg0: i32) -> (i32, i32) {
    %c0_i32 = arith.constant 0 : i32
    %c0_i32_0 = arith.constant 0 : i32
    return %arg0, %c0_i32 : i32, i32
  }
  func.func @transform_1(%arg0: i32) -> (i32, i32) {
    %c0_i32 = arith.constant 0 : i32
    %c0_i32_0 = arith.constant 0 : i32
    %c0_i32_1 = arith.constant 0 : i32
    return %c0_i32, %c0_i32_0 : i32, i32
  }
  func.func @transform_2(%arg0: i32) -> (i32, i32, i32) {
    %c0_i32 = arith.constant 0 : i32
    %c0_i32_0 = arith.constant 0 : i32
    %c0_i32_1 = arith.constant 0 : i32
    %c0_i32_2 = arith.constant 0 : i32
    return %c0_i32, %c0_i32_0, %c0_i32_1 : i32, i32, i32
  }
  func.func @transform_3(%arg0: i32) -> (i32, i32) {
    %c0_i32 = arith.constant 0 : i32
    %c0_i32_0 = arith.constant 0 : i32
    %c0_i32_1 = arith.constant 0 : i32
    return %c0_i32, %c0_i32_0 : i32, i32
  }
  func.func @transform_4(%arg0: i32) -> (i32, i32) {
    %c0_i32 = arith.constant 0 : i32
    %c0_i32_0 = arith.constant 0 : i32
    %c0_i32_1 = arith.constant 0 : i32
    return %c0_i32, %c0_i32_0 : i32, i32
  }
  func.func @transform_5(%arg0: i32) -> (i32, i32) {
    %c0_i32 = arith.constant 0 : i32
    %c0_i32_0 = arith.constant 0 : i32
    %c0_i32_1 = arith.constant 0 : i32
    return %c0_i32, %c0_i32_0 : i32, i32
  }
  func.func @transform_6(%arg0: i32) -> (i32, i32) {
    %c0_i32 = arith.constant 0 : i32
    %c0_i32_0 = arith.constant 0 : i32
    %c0_i32_1 = arith.constant 0 : i32
    return %c0_i32, %c0_i32_0 : i32, i32
  }
  func.func @transform_7(%arg0: i32) -> (i32, i32) {
    %c0_i32 = arith.constant 0 : i32
    %c0_i32_0 = arith.constant 0 : i32
    return %arg0, %c0_i32 : i32, i32
  }
}

</mosaic_0001>

<llo_original>
// kernel: tpu_custom_call.1
$region0: #{tpu_custom_call.1}
  #allocation0 [shape = 'u32[]', space=smem, size = 0x4, offset = 0x4, fixed_abs, tag = 'smem constant byte address 0x4 - core index']
  #allocation1 [shape = 'u32[72,128]{1,0:T(1,128)}', space=vmem, size = 0x9000, scoped, tag = 'internal scratch']
  %s0 = inlined_call_operand.hbm [shape: f32[8,32], index: 0, kind: input, shape index: {}]
  %s1 = inlined_call_operand.hbm [shape: f32[32,64], index: 1, kind: input, shape index: {}]
  %s2 = inlined_call_operand.hbm [shape: f32[2,64,64], index: 2, kind: input, shape index: {}]
  %s3 = inlined_call_operand.hbm [shape: f32[7,64], index: 3, kind: input, shape index: {}]
  %s4 = inlined_call_operand.hbm [shape: f32[64,128], index: 4, kind: input, shape index: {}]
  %s5 = inlined_call_operand.hbm [shape: f32[32,128], index: 5, kind: input, shape index: {}]
  %s6 = inlined_call_operand.vmem [shape: f32[1,128], index: 6, kind: input, shape index: {}]
  %s7 = inlined_call_operand.hbm [shape: f32[8,128], index: 7, kind: output, shape index: {}]
  %s8 = sld [smem:[#allocation0]]
  $region62: #{tpu_custom_call.1} parent=0
    _
  %s10 = ssub.s32 1, %s8
  %s11 = scalar_select 0, %s10, %s8
  $region1: #{tpu_custom_call.1} parent=0
    #allocation2 [shape = 'u8[4096]{0}', space=vmem, size = 0x1000, scoped, tag = 'input window, operand 0, single buffered']
    #allocation3 [shape = 's32[1]{0}', space=sflag, size = 0x4, scoped, tag = 'scoped memory for tpu_custom_call.1']
    #allocation4 [shape = 's32[1]{0}', space=sflag, size = 0x4, scoped, tag = 'scoped memory for tpu_custom_call.1']
    #allocation5 [shape = 'u8[16384]{0}', space=vmem, size = 0x4000, scoped, tag = 'input window, operand 1, single buffered']
    #allocation6 [shape = 's32[1]{0}', space=sflag, size = 0x4, scoped, tag = 'scoped memory for tpu_custom_call.1']
    #allocation7 [shape = 'u8[65536]{0}', space=vmem, size = 0x10000, scoped, tag = 'input window, operand 2, single buffered']
    #allocation8 [shape = 'u8[4096]{0}', space=vmem, size = 0x1000, scoped, tag = 'input window, operand 3, single buffered']
    #allocation9 [shape = 's32[1]{0}', space=sflag, size = 0x4, scoped, tag = 'scoped memory for tpu_custom_call.1']
    #allocation10 [shape = 'u8[32768]{0}', space=vmem, size = 0x8000, scoped, tag = 'input window, operand 4, single buffered']
    #allocation11 [shape = 'u8[16384]{0}', space=vmem, size = 0x4000, scoped, tag = 'input window, operand 5, single buffered']
    #allocation12 [shape = 's32[1]{0}', space=sflag, size = 0x4, scoped, tag = 'scoped memory for tpu_custom_call.1']
    #allocation13 [shape = 'u8[4096]{0}', space=vmem, size = 0x1000, scoped, tag = 'output window, operand 0, single buffered']
    %12 = vsyncpa [#allocation3], 0
    %13 = vsyncpa [#allocation6], 0
    %14 = vsyncpa [#allocation9], 0
    %15 = vsyncpa [#allocation12], 0
    %16 = vsyncpa [#allocation4], 0
    // Predicated region
    $region2: #{tpu_custom_call.1} parent=1 // pred_check
      _
    $region3: #{tpu_custom_call.1} parent=1 // pred_check_branch
      %18 = sbr.rel (0) target = $region5
    $region4: #{tpu_custom_call.1} parent=1 // pred_region
      %20 = vsyncadd [#allocation3], 0
      %s22 = sshll.u32 %s0, 4
      %s23 = int_to_ptr.hbm [resolvable:$true] %s22
      %s24 = sshll.u32 [#allocation2], 4
      %s25 = int_to_ptr.vmem [resolvable:$true] %s24
      %27 = dma.hbm_to_vmem [thread:$0]  %s23, 128, %s25, [#allocation3]
    $region5: #{tpu_custom_call.1} parent=1 // pred_fallthru
      _
    // Predicated region
    $region6: #{tpu_custom_call.1} parent=1 // pred_check
      _
    $region7: #{tpu_custom_call.1} parent=1 // pred_check_branch
      %29 = sbr.rel (0) target = $region9
    $region8: #{tpu_custom_call.1} parent=1 // pred_region
      %31 = vsyncadd [#allocation6], 0
      %s32 = sshll.u32 %s1, 4
      %s33 = int_to_ptr.hbm [resolvable:$true] %s32
      %s34 = sshll.u32 [#allocation5], 4
      %s35 = int_to_ptr.vmem [resolvable:$true] %s34
      %40 = dma.hbm_to_vmem [thread:$0]  %s33, 512, %s35, [#allocation6], 128, 128, 8
    $region9: #{tpu_custom_call.1} parent=1 // pred_fallthru
      _
    // Predicated region
    $region10: #{tpu_custom_call.1} parent=1 // pred_check
      _
    $region11: #{tpu_custom_call.1} parent=1 // pred_check_branch
      %42 = sbr.rel (0) target = $region13
    $region12: #{tpu_custom_call.1} parent=1 // pred_region
      %44 = vsyncadd [#allocation6], 0
      %s45 = sshll.u32 %s2, 4
      %s46 = int_to_ptr.hbm [resolvable:$true] %s45
      %s47 = sshll.u32 [#allocation7], 4
      %s48 = int_to_ptr.vmem [resolvable:$true] %s47
      %53 = dma.hbm_to_vmem [thread:$0]  %s46, 2048, %s48, [#allocation6], 128, 128, 8
    $region13: #{tpu_custom_call.1} parent=1 // pred_fallthru
      _
    // Predicated region
    $region14: #{tpu_custom_call.1} parent=1 // pred_check
      _
    $region15: #{tpu_custom_call.1} parent=1 // pred_check_branch
      %55 = sbr.rel (0) target = $region17
    $region16: #{tpu_custom_call.1} parent=1 // pred_region
      %57 = vsyncadd [#allocation9], 0
      %s59 = sshll.u32 %s3, 4
      %s60 = int_to_ptr.hbm [resolvable:$true] %s59
      %s61 = sshll.u32 [#allocation8], 4
      %s62 = int_to_ptr.vmem [resolvable:$true] %s61
      %64 = dma.hbm_to_vmem [thread:$0]  %s60, 128, %s62, [#allocation9]
    $region17: #{tpu_custom_call.1} parent=1 // pred_fallthru
      _
    // Predicated region
    $region18: #{tpu_custom_call.1} parent=1 // pred_check
      _
    $region19: #{tpu_custom_call.1} parent=1 // pred_check_branch
      %66 = sbr.rel (0) target = $region21
    $region20: #{tpu_custom_call.1} parent=1 // pred_region
      %68 = vsyncadd [#allocation9], 0
      %s69 = sshll.u32 %s4, 4
      %s70 = int_to_ptr.hbm [resolvable:$true] %s69
      %s71 = sshll.u32 [#allocation10], 4
      %s72 = int_to_ptr.vmem [resolvable:$true] %s71
      %77 = dma.hbm_to_vmem [thread:$0]  %s70, 1024, %s72, [#allocation9], 128, 128, 8
    $region21: #{tpu_custom_call.1} parent=1 // pred_fallthru
      _
    // Predicated region
    $region22: #{tpu_custom_call.1} parent=1 // pred_check
      _
    $region23: #{tpu_custom_call.1} parent=1 // pred_check_branch
      %79 = sbr.rel (0) target = $region25
    $region24: #{tpu_custom_call.1} parent=1 // pred_region
      %81 = vsyncadd [#allocation12], 0
      %s82 = sshll.u32 %s5, 4
      %s83 = int_to_ptr.hbm [resolvable:$true] %s82
      %s84 = sshll.u32 [#allocation11], 4
      %s85 = int_to_ptr.vmem [resolvable:$true] %s84
      %90 = dma.hbm_to_vmem [thread:$0]  %s83, 512, %s85, [#allocation12], 128, 128, 8
    $region25: #{tpu_custom_call.1} parent=1 // pred_fallthru
      _
    // Predicated region
    $region26: #{tpu_custom_call.1} parent=1 // pred_check
      _
    $region27: #{tpu_custom_call.1} parent=1 // pred_check_branch
      %92 = sbr.rel (0) target = $region29
    $region28: #{tpu_custom_call.1} parent=1 // pred_region
      _
    $region29: #{tpu_custom_call.1} parent=1 // pred_fallthru
      _
    // Predicated region
    $region30: #{tpu_custom_call.1} parent=1 // pred_check
      _
    $region31: #{tpu_custom_call.1} parent=1 // pred_check_branch
      %94 = sbr.rel (0) target = $region33
    $region32: #{tpu_custom_call.1} parent=1 // pred_region
      %96 = dma.done [#allocation3], 128
    $region33: #{tpu_custom_call.1} parent=1 // pred_fallthru
      _
    // Predicated region
    $region34: #{tpu_custom_call.1} parent=1 // pred_check
      _
    $region35: #{tpu_custom_call.1} parent=1 // pred_check_branch
      %98 = sbr.rel (0) target = $region37
    $region36: #{tpu_custom_call.1} parent=1 // pred_region
      %100 = dma.done [#allocation6], 512
    $region37: #{tpu_custom_call.1} parent=1 // pred_fallthru
      _
    // Predicated region
    $region38: #{tpu_custom_call.1} parent=1 // pred_check
      _
    $region39: #{tpu_custom_call.1} parent=1 // pred_check_branch
      %102 = sbr.rel (0) target = $region41
    $region40: #{tpu_custom_call.1} parent=1 // pred_region
      %104 = dma.done [#allocation6], 2048
    $region41: #{tpu_custom_call.1} parent=1 // pred_fallthru
      _
    // Predicated region
    $region42: #{tpu_custom_call.1} parent=1 // pred_check
      _
    $region43: #{tpu_custom_call.1} parent=1 // pred_check_branch
      %106 = sbr.rel (0) target = $region45
    $region44: #{tpu_custom_call.1} parent=1 // pred_region
      %108 = dma.done [#allocation9], 128
    $region45: #{tpu_custom_call.1} parent=1 // pred_fallthru
      _
    // Predicated region
    $region46: #{tpu_custom_call.1} parent=1 // pred_check
      _
    $region47: #{tpu_custom_call.1} parent=1 // pred_check_branch
      %110 = sbr.rel (0) target = $region49
    $region48: #{tpu_custom_call.1} parent=1 // pred_region
      %112 = dma.done [#allocation9], 1024
    $region49: #{tpu_custom_call.1} parent=1 // pred_fallthru
      _
    // Predicated region
    $region50: #{tpu_custom_call.1} parent=1 // pred_check
      _
    $region51: #{tpu_custom_call.1} parent=1 // pred_check_branch
      %114 = sbr.rel (0) target = $region53
    $region52: #{tpu_custom_call.1} parent=1 // pred_region
      %116 = dma.done [#allocation12], 512
    $region53: #{tpu_custom_call.1} parent=1 // pred_fallthru
      _
    %v117 = vld [vmem:[#allocation2] sm:$0xff]
    %v118 = vld [vmem:[#allocation5] sm:$0xff]
    %v119 = vld [vmem:[#allocation5 + $0x8] sm:$0xff]
    %v120 = vld [vmem:[#allocation5 + $0x10] sm:$0xff]
    %v121 = vld [vmem:[#allocation5 + $0x18] sm:$0xff]
    %v122 = vld [vmem:[#allocation8] sm:$0x1]
    %v123 = vperm.slane %v122, 0
    %vm124 = vcmask 261120
    %v126 = vsel %vm124, %v117, 0
    %128 = vmatpush.msra.mxu0 0.0
    %129 = vmatpush.msra.mxu0 0.0
    %130 = vmatpush.msra.mxu0 0.0
    %131 = vmatpush.msra.mxu0 0.0
    %132 = vmatpush.msra.mxu0 0.0
    %133 = vmatpush.msra.mxu0 0.0
    %134 = vmatpush.msra.mxu0 0.0
    %135 = vmatpush.msra.mxu0 0.0
    %136 = vmatpush.msra.mxu0 0.0
    %137 = vmatpush.msra.mxu0 0.0
    %138 = vmatpush.msra.mxu0 0.0
    %139 = vmatpush.msra.mxu0 0.0
    %140 = vmatpush.msra.mxu0 %v121
    %141 = vmatpush.msra.mxu0 %v120
    %142 = vmatpush.msra.mxu0 %v119
    %143 = vmatpush.msra.mxu0 %v118
    %144 = vmatmul.f32.gmra.mxu0 %v126
    %v145 = vpop.f32.mrf.mxu0
    %v146 = vadd.f32 %v123, %v145
    %147 = vdwg.mxu0
    %v148 = vmax.f32 %v146, 0.0
    %v149 = vld [vmem:[#allocation7] sm:$0xff]
    %v150 = vld [vmem:[#allocation7 + $0x8] sm:$0xff]
    %v151 = vld [vmem:[#allocation7 + $0x10] sm:$0xff]
    %v152 = vld [vmem:[#allocation7 + $0x18] sm:$0xff]
    %v153 = vld [vmem:[#allocation7 + $0x20] sm:$0xff]
    %v154 = vld [vmem:[#allocation7 + $0x28] sm:$0xff]
    %v155 = vld [vmem:[#allocation7 + $0x30] sm:$0xff]
    %v156 = vld [vmem:[#allocation7 + $0x38] sm:$0xff]
    %v157 = vld [vmem:[#allocation8 + $0x1] sm:$0x1]
    %v158 = vperm.slane %v157, 0
    %vm159 = vcmask 523264
    %v161 = vsel %vm159, %v148, 0
    %163 = vmatpush.msra.mxu0 0.0
    %164 = vmatpush.msra.mxu0 0.0
    %165 = vmatpush.msra.mxu0 0.0
    %166 = vmatpush.msra.mxu0 0.0
    %167 = vmatpush.msra.mxu0 0.0
    %168 = vmatpush.msra.mxu0 0.0
    %169 = vmatpush.msra.mxu0 0.0
    %170 = vmatpush.msra.mxu0 0.0
    %171 = vmatpush.msra.mxu0 %v156
    %172 = vmatpush.msra.mxu0 %v155
    %173 = vmatpush.msra.mxu0 %v154
    %174 = vmatpush.msra.mxu0 %v153
    %175 = vmatpush.msra.mxu0 %v152
    %176 = vmatpush.msra.mxu0 %v151
    %177 = vmatpush.msra.mxu0 %v150
    %178 = vmatpush.msra.mxu0 %v149
    %179 = vmatmul.f32.gmra.mxu0 %v161
    %v180 = vpop.f32.mrf.mxu0
    %v181 = vadd.f32 %v158, %v180
    %182 = vdwg.mxu0
    %v183 = vsel %vm159, %v181, 0.0
    %184 = vadd.xlane.f32.xlu0 %v183
    %v185 = vpop.xlane.xlu0 %184
    %v186 = vmul.f32 %v185, 0.015625
    %v187 = vmul.f32 %v181, %v181
    %v188 = vsel %vm159, %v187, 0.0
    %189 = vadd.xlane.f32.xlu0 %v188
    %v190 = vpop.xlane.xlu0 %189
    %v191 = vmul.f32 %v190, 0.015625
    %v192 = vmul.f32 %v186, %v186
    %v193 = vsub.f32 %v191, %v192
    %v194 = vsub.f32 %v181, %v186
    %v195 = vadd.f32 %v193, 1e-05
    %v196 = vrsqrt.pop %v195
    %v197 = vmul.f32 %v196, %v195
    %v198 = vmul.f32 %v197, %v196
    %v199 = vmul.f32 0.5, %v198
    %v200 = vsub.f32 1.5, %v199
    %v201 = vmul.f32 %v196, %v200
    %vm202 = vweird.f32 %v195
    %vm203 = vweird.f32 %v196
    %vm204 = vmor %vm202, %vm203
    %v205 = vsel %vm204, %v196, %v201
    %v206 = vmul.f32 %v194, %v205
    %v207 = vld [vmem:[#allocation8 + $0x2] sm:$0x1]
    %v208 = vperm.slane %v207, 0
    %v209 = vmul.f32 %v206, %v208
    %v210 = vld [vmem:[#allocation8 + $0x3] sm:$0x1]
    %v211 = vperm.slane %v210, 0
    %v212 = vadd.f32 %v209, %v211
    %v213 = vmax.f32 %v212, 0.0
    %s214 = scalar_lea.vmem [#allocation7], 64
    %v215 = vld [vmem:[%s214] sm:$0xff]
    %v216 = vld [vmem:[%s214 + $0x8] sm:$0xff]
    %v217 = vld [vmem:[%s214 + $0x10] sm:$0xff]
    %v218 = vld [vmem:[%s214 + $0x18] sm:$0xff]
    %v219 = vld [vmem:[%s214 + $0x20] sm:$0xff]
    %v220 = vld [vmem:[%s214 + $0x28] sm:$0xff]
    %v221 = vld [vmem:[%s214 + $0x30] sm:$0xff]
    %v222 = vld [vmem:[%s214 + $0x38] sm:$0xff]
    %v223 = vld [vmem:[#allocation8 + $0x4] sm:$0x1]
    %v224 = vperm.slane %v223, 0
    %v226 = vsel %vm159, %v213, 0
    %228 = vmatpush.msra.mxu0 0.0
    %229 = vmatpush.msra.mxu0 0.0
    %230 = vmatpush.msra.mxu0 0.0
    %231 = vmatpush.msra.mxu0 0.0
    %232 = vmatpush.msra.mxu0 0.0
    %233 = vmatpush.msra.mxu0 0.0
    %234 = vmatpush.msra.mxu0 0.0
    %235 = vmatpush.msra.mxu0 0.0
    %236 = vmatpush.msra.mxu0 %v222
    %237 = vmatpush.msra.mxu0 %v221
    %238 = vmatpush.msra.mxu0 %v220
    %239 = vmatpush.msra.mxu0 %v219
    %240 = vmatpush.msra.mxu0 %v218
    %241 = vmatpush.msra.mxu0 %v217
    %242 = vmatpush.msra.mxu0 %v216
    %243 = vmatpush.msra.mxu0 %v215
    %244 = vmatmul.f32.gmra.mxu0 %v226
    %v245 = vpop.f32.mrf.mxu0
    %v246 = vadd.f32 %v224, %v245
    %247 = vdwg.mxu0
    %v248 = vsel %vm159, %v246, 0.0
    %249 = vadd.xlane.f32.xlu0 %v248
    %v250 = vpop.xlane.xlu0 %249
    %v251 = vmul.f32 %v250, 0.015625
    %v252 = vmul.f32 %v246, %v246
    %v253 = vsel %vm159, %v252, 0.0
    %254 = vadd.xlane.f32.xlu0 %v253
    %v255 = vpop.xlane.xlu0 %254
    %v256 = vmul.f32 %v255, 0.015625
    %v257 = vmul.f32 %v251, %v251
    %v258 = vsub.f32 %v256, %v257
    %v259 = vsub.f32 %v246, %v251
    %v260 = vadd.f32 %v258, 1e-05
    %v261 = vrsqrt.pop %v260
    %v262 = vmul.f32 %v261, %v260
    %v263 = vmul.f32 %v262, %v261
    %v264 = vmul.f32 0.5, %v263
    %v265 = vsub.f32 1.5, %v264
    %v266 = vmul.f32 %v261, %v265
    %vm267 = vweird.f32 %v260
    %vm268 = vweird.f32 %v261
    %vm269 = vmor %vm267, %vm268
    %v270 = vsel %vm269, %v261, %v266
    %v271 = vmul.f32 %v259, %v270
    %v272 = vld [vmem:[#allocation8 + $0x5] sm:$0x1]
    %v273 = vperm.slane %v272, 0
    %v274 = vmul.f32 %v271, %v273
    %v275 = vld [vmem:[#allocation8 + $0x6] sm:$0x1]
    %v276 = vperm.slane %v275, 0
    %v277 = vadd.f32 %v274, %v276
    %v278 = vmax.f32 %v277, 0.0
    %v279 = vld [vmem:[#allocation10] sm:$0xff]
    %v280 = vld [vmem:[#allocation10 + $0x8] sm:$0xff]
    %v281 = vld [vmem:[#allocation10 + $0x10] sm:$0xff]
    %v282 = vld [vmem:[#allocation10 + $0x18] sm:$0xff]
    %v283 = vld [vmem:[#allocation10 + $0x20] sm:$0xff]
    %v284 = vld [vmem:[#allocation10 + $0x28] sm:$0xff]
    %v285 = vld [vmem:[#allocation10 + $0x30] sm:$0xff]
    %v286 = vld [vmem:[#allocation10 + $0x38] sm:$0xff]
    %v287 = vld [vmem:[#allocation11] sm:$0xff]
    %v288 = vld [vmem:[#allocation11 + $0x8] sm:$0xff]
    %v289 = vld [vmem:[#allocation11 + $0x10] sm:$0xff]
    %v290 = vld [vmem:[#allocation11 + $0x18] sm:$0xff]
    %291 = vmatpush.msra.mxu0 0.0
    %292 = vmatpush.msra.mxu0 0.0
    %293 = vmatpush.msra.mxu0 0.0
    %294 = vmatpush.msra.mxu0 0.0
    %295 = vmatpush.msra.mxu0 0.0
    %296 = vmatpush.msra.mxu0 0.0
    %297 = vmatpush.msra.mxu0 0.0
    %298 = vmatpush.msra.mxu0 0.0
    %299 = vmatpush.msra.mxu0 0.0
    %300 = vmatpush.msra.mxu0 0.0
    %301 = vmatpush.msra.mxu0 0.0
    %302 = vmatpush.msra.mxu0 0.0
    %303 = vmatpush.msra.mxu0 %v290
    %304 = vmatpush.msra.mxu0 %v289
    %305 = vmatpush.msra.mxu0 %v288
    %306 = vmatpush.msra.mxu0 %v287
    %307 = vmatmul.f32.gmra.mxu0 %v126
    %v308 = vpop.f32.mrf.mxu0
    %v309 = vadd.f32 0.0, %v308
    %310 = vdwg.mxu0
    %v312 = vsel %vm159, %v278, 0
    %314 = vmatpush.msra.mxu0 0.0
    %315 = vmatpush.msra.mxu0 0.0
    %316 = vmatpush.msra.mxu0 0.0
    %317 = vmatpush.msra.mxu0 0.0
    %318 = vmatpush.msra.mxu0 0.0
    %319 = vmatpush.msra.mxu0 0.0
    %320 = vmatpush.msra.mxu0 0.0
    %321 = vmatpush.msra.mxu0 0.0
    %322 = vmatpush.msra.mxu0 %v286
    %323 = vmatpush.msra.mxu0 %v285
    %324 = vmatpush.msra.mxu0 %v284
    %325 = vmatpush.msra.mxu0 %v283
    %326 = vmatpush.msra.mxu0 %v282
    %327 = vmatpush.msra.mxu0 %v281
    %328 = vmatpush.msra.mxu0 %v280
    %329 = vmatpush.msra.mxu0 %v279
    %330 = vmatmul.f32.gmra.mxu0 %v312
    %v331 = vpop.f32.mrf.mxu0
    %v332 = vadd.f32 %v309, %v331
    %333 = vdwg.mxu0
    %v334 = vld [vmem:[%s6] sm:$0x1]
    %v336 = vperm.slane %v334, 0
    %v338 = vadd.f32 %v332, %v336
    %339 = vadd.xlane.f32.xlu0 %v338
    %v340 = vpop.xlane.xlu0 %339
    %v341 = vsub.f32 %v340, %v338
    %v342 = vmul.f32 %v341, 0.0625
    %344 = vset.pattern.permute.xlu0 16
    %345 = vperm.xlu0 %344, %v342
    %v346 = vpop.permute.xlu0 %345
    %v348 = vsub.f32 %v338, %v346
    %350 = vset.pattern.permute.xlu0 16
    %351 = vperm.xlu0 %350, %v338
    %v352 = vpop.permute.xlu0 %351
    %v354 = vadd.f32 %v352, %v348
    %355 = vst [vmem:[#allocation13] sm:$0xff] %v354
    // Predicated region
    $region54: #{tpu_custom_call.1} parent=1 // pred_check
      _
    $region55: #{tpu_custom_call.1} parent=1 // pred_check_branch
      %357 = sbr.rel (0) target = $region57
    $region56: #{tpu_custom_call.1} parent=1 // pred_region
      %359 = vsyncadd [#allocation4], 0
      %s361 = sshll.u32 [#allocation13], 4
      %s362 = int_to_ptr.vmem [resolvable:$true] %s361
      %s363 = sshll.u32 %s7, 4
      %s364 = int_to_ptr.hbm [resolvable:$true] %s363
      %366 = dma.vmem_to_hbm [thread:$0]  %s362, 128, %s364, [#allocation4]
    $region57: #{tpu_custom_call.1} parent=1 // pred_fallthru
      _
    // Predicated region
    $region58: #{tpu_custom_call.1} parent=1 // pred_check
      _
    $region59: #{tpu_custom_call.1} parent=1 // pred_check_branch
      %368 = sbr.rel (0) target = $region61
    $region60: #{tpu_custom_call.1} parent=1 // pred_region
      %370 = dma.done [#allocation4], 128
    $region61: #{tpu_custom_call.1} parent=1 // pred_fallthru
      _
    %371 = vsyncpa [#allocation3], 1
    %372 = vsyncpa [#allocation6], 1
    %373 = vsyncpa [#allocation9], 1
    %374 = vsyncpa [#allocation12], 1
    %375 = vsyncpa [#allocation4], 1

</llo_original>
